<compile_context>
chip_gen: v7x
topology: tpu7x:2x2x1
jax: 0.10.0
libtpu: 0.0.40
codegen_flags: <defaults>
</compile_context>

<pallas_src>
import functools

import jax
import jax.numpy as jnp
import numpy as np
from jax.experimental import pallas as pl
from jax.experimental.pallas import tpu as pltpu


# ----------------------------------------------------------------------------
# Kernel: per channel-batch block, separable interpolation
#   width-first : tmp = x @ Ww^T   (flat MXU matmul),  out = Wh @ tmp (batched)
#   height-first: tmp = Wh @ x     (batched),          out = tmp @ Ww^T (flat)
# ----------------------------------------------------------------------------
def _upsample_kernel(whb_ref, wwt_ref, x_ref, o_ref, tmp_ref, *, width_first):
    tc, hin, win = x_ref.shape
    _, hout, wout = o_ref.shape

    if width_first:
        # Pass 1 (flat): (TC*Hin, Win) @ (Win, Wout) with f32 accumulation
        # written straight into the f32 scratch (no bf16 round trip / cast).
        # The flatten is a free view when Hin % 8 == 0 (order selection
        # prefers that side).
        xf = x_ref[...].reshape(tc * hin, win)
        tmp_ref[...] = jnp.dot(
            xf, wwt_ref[...],
            preferred_element_type=jnp.float32).reshape(tc, hin, wout)
        # Pass 2: ONE batched dot_general over the channel block
        # (out[t] = Wh @ tmp[t]); no Python unroll of TC tiny matmuls.
        out = jnp.einsum("toh,thw->tow", whb_ref[...], tmp_ref[...],
                         preferred_element_type=jnp.float32)
        o_ref[...] = out.astype(o_ref.dtype)
    else:
        # Pass 1: batched Wh @ x[t] accumulated in f32 straight into scratch.
        tmp_ref[...] = jnp.einsum("toh,thw->tow", whb_ref[...], x_ref[...],
                                  preferred_element_type=jnp.float32)
        # Pass 2 (flat): (TC*Hout, Win) @ (Win, Wout).
        tf = tmp_ref[...].reshape(tc * hout, win)
        out = jnp.dot(tf, wwt_ref[...], preferred_element_type=jnp.float32)
        o_ref[...] = out.reshape(tc, hout, wout).astype(o_ref.dtype)
    # TODO(synk): Wout < 128 keeps the final stores masked (vst.msk); a fully
    # lane-dense output packing would need an NCHW->NHWC-style relayout in HBM
    # (full-tensor extra traffic) and is not a win for this HBM-bound kernel.
    # TODO(synk): VPU fast path for mode='nearest' (pure row/lane selection)
    # is skipped: lane-dim gather lowering is not guaranteed in Mosaic, and
    # the one-hot matmul path is exact and stays under the DMA shadow.


def _pick_order(hin, win, hout, wout):
    """True -> width-first.  Prefer the order whose flat-pass row count is a
    multiple of 8 (free flatten view), then the smaller f32 intermediate, then
    fewer MXU FLOPs."""
    wf = (hin % 8 != 0, hin * wout, hin * win * wout + hin * wout * hout)
    hf = (hout % 8 != 0, hout * win, hout * hin * win + hout * win * wout)
    return wf <= hf


def _choose_block(nc, hin, win, hout, wout, itemsize, width_first):
    """Pick channel-block size TC, grid length, padded NC and the scoped VMEM
    limit from the chip's actual VMEM capacity."""
    try:
        vmem_cap = int(pltpu.get_tpu_info().vmem_capacity_bytes)
    except Exception:
        vmem_cap = 64 * 1024 * 1024          # conservative (v7x per-core VMEM)
    budget = int(vmem_cap * 0.40)            # data budget for the blocks
    vmem_limit = min(int(vmem_cap * 0.75), 100 * 1024 * 1024)

    tmp_elems = hin * wout if width_first else hout * win
    per_ch = (2 * hin * win * itemsize       # input block (double-buffered)
              + 2 * hout * wout * itemsize   # output block (double-buffered)
              + 4 * tmp_elems                # f32 intermediate scratch
              + 2 * 4 * hout * hin           # broadcast Wh (resident, f32 worst)
              + 4 * hout * wout)             # f32 pass-2 product before cast
    fixed = 2 * 4 * win * wout               # resident Ww^T
    tc_max = int(min(max(1, (budget - fixed) // per_ch), 1024))
    # TODO(synk): for very large spatial sizes a single channel may not fit the
    # budget; spatial tiling of H/W is not implemented (NAS shapes are small).

    steps = -(-nc // min(tc_max, nc))
    steps = max(steps, min(4, nc))           # >= 4 steps when possible (v7x: 2 TCs)
    if steps > 1 and steps % 2:
        steps += 1                           # even split across both TensorCores
    tc = -(-nc // steps)
    nc_pad = steps * tc
    return tc, steps, nc_pad, vmem_limit


def _pallas_upsample(x_nc, wh_np, wwt_np, hout, wout):
    """x_nc: (NC, Hin, Win) -> (NC, Hout, Wout)."""
    nc, hin, win = x_nc.shape
    dtype = x_nc.dtype
    itemsize = jnp.dtype(dtype).itemsize

    width_first = _pick_order(hin, win, hout, wout)
    tc, steps, nc_pad, vmem_limit = _choose_block(
        nc, hin, win, hout, wout, itemsize, width_first)

    # Weight dtypes: the weight multiplying x matches x.dtype (native MXU,
    # no full-block promotion); the weight multiplying the f32 intermediate
    # stays f32 (no bf16 rounding on the second pass).
    if width_first:
        wwt_dtype, whb_dtype = dtype, jnp.float32
        tmp_shape = (tc, hin, wout)
    else:
        wwt_dtype, whb_dtype = jnp.float32, dtype
        tmp_shape = (tc, hout, win)

    wwt = jnp.asarray(wwt_np, dtype=wwt_dtype)                        # (Win, Wout)
    whb = jnp.broadcast_to(jnp.asarray(wh_np, dtype=whb_dtype)[None],
                           (tc, hout, hin))                           # resident

    if nc_pad != nc:
        x_nc = jnp.pad(x_nc, ((0, nc_pad - nc), (0, 0), (0, 0)))

    kernel = functools.partial(_upsample_kernel, width_first=width_first)
    out = pl.pallas_call(
        kernel,
        out_shape=jax.ShapeDtypeStruct((nc_pad, hout, wout), dtype),
        grid_spec=pltpu.PrefetchScalarGridSpec(
            num_scalar_prefetch=0,
            grid=(steps,),
            in_specs=[
                pl.BlockSpec((tc, hout, hin), lambda i: (0, 0, 0)),   # Wh broadcast
                pl.BlockSpec((win, wout), lambda i: (0, 0)),          # Ww^T
                pl.BlockSpec((tc, hin, win), lambda i: (i, 0, 0)),    # x block
            ],
            out_specs=pl.BlockSpec((tc, hout, wout), lambda i: (i, 0, 0)),
            scratch_shapes=[pltpu.VMEM(tmp_shape, jnp.float32)],
        ),
        compiler_params=pltpu.CompilerParams(
            dimension_semantics=("parallel",),
            vmem_limit_bytes=vmem_limit),
    )(whb, wwt, x_nc)

    if nc_pad != nc:
        out = out[:nc]
    return out


# ----------------------------------------------------------------------------
# Glue: build separable interpolation matrices (out_size, in_size)
# ----------------------------------------------------------------------------
def _interp_matrix(in_size, out_size, mode, align_corners):
    if mode == "nearest":
        # PyTorch nearest (size given): src = floor(dst * in / out), clamped.
        dst = np.arange(out_size, dtype=np.float64)
        src = np.clip(np.floor(dst * in_size / out_size).astype(np.int64),
                      0, in_size - 1)
        w = np.zeros((out_size, in_size), dtype=np.float32)
        w[np.arange(out_size), src] = 1.0
        return w
    elif mode in ("bilinear", "linear"):
        dst = np.arange(out_size, dtype=np.float64)
        if align_corners:
            src = (dst * (in_size - 1) / (out_size - 1) if out_size > 1
                   else np.zeros_like(dst))
        else:
            src = np.maximum((dst + 0.5) * in_size / out_size - 0.5, 0.0)
        i0 = np.clip(np.floor(src).astype(np.int64), 0, in_size - 1)
        i1 = np.clip(i0 + 1, 0, in_size - 1)
        frac = (src - i0).astype(np.float32)
        w = np.zeros((out_size, in_size), dtype=np.float32)
        np.add.at(w, (np.arange(out_size), i0), 1.0 - frac)
        np.add.at(w, (np.arange(out_size), i1), frac)
        return w
    else:
        # TODO(synk): 'bicubic'/'area' modes not implemented (non-separable /
        # different weighting); nearest and bilinear cover the module default.
        raise NotImplementedError(f"mode {mode!r} not supported")


# ----------------------------------------------------------------------------
# Module-equivalent wrapper (ToOnnxUpsample.forward semantics)
# ----------------------------------------------------------------------------
def to_onnx_upsample(x, target=None, size=None, scale_factor=None,
                     mode="nearest", align_corners=None):
    n, c, hin, win = x.shape
    if target is not None:
        hout, wout = int(target.shape[-2]), int(target.shape[-1])
    elif size is not None:
        if isinstance(size, (tuple, list)):
            if len(size) == 2:
                hout, wout = int(size[0]), int(size[1])
            else:
                hout = wout = int(size[0])
        else:
            hout = wout = int(size)
    elif scale_factor is not None:
        if isinstance(scale_factor, (tuple, list)):
            sh, sw = scale_factor
        else:
            sh = sw = scale_factor
        # TODO(synk): matches int(in*scale) + floor(dst*in/out); PyTorch nearest
        # with recompute_scale_factor=False uses floor(dst/scale), which can
        # differ by one source pixel in rare edge cases.
        hout, wout = int(hin * sh), int(win * sw)
    else:
        raise ValueError("either target, size or scale_factor must be given")

    wh_np = _interp_matrix(hin, hout, mode, align_corners)      # (Hout, Hin)
    ww_np = _interp_matrix(win, wout, mode, align_corners)      # (Wout, Win)

    x_nc = x.reshape(n * c, hin, win)
    out = _pallas_upsample(x_nc, wh_np, ww_np.T, hout, wout)
    return out.reshape(n, c, hout, wout)


# ----------------------------------------------------------------------------
# Pure-JAX references for sanity checking the kernel
# ----------------------------------------------------------------------------
def _reference_nearest(x, hout, wout):
    n, c, hin, win = x.shape
    ridx = jnp.clip(jnp.floor(jnp.arange(hout) * hin / hout).astype(jnp.int32),
                    0, hin - 1)
    cidx = jnp.clip(jnp.floor(jnp.arange(wout) * win / wout).astype(jnp.int32),
                    0, win - 1)
    return x[:, :, ridx, :][:, :, :, cidx]


def _reference_separable(x, hout, wout, mode, align_corners):
    n, c, hin, win = x.shape
    wh = jnp.asarray(_interp_matrix(hin, hout, mode, align_corners))
    ww = jnp.asarray(_interp_matrix(win, wout, mode, align_corners))
    return jnp.einsum("oh,nchw,pw->ncop", wh, x.astype(jnp.float32), ww,
                      precision=jax.lax.Precision.HIGHEST)


if __name__ == "__main__":
    key = jax.random.PRNGKey(0)
    kx, kt = jax.random.split(key)

    # small shapes consistent with the module's NCHW inputs
    x = jax.random.normal(kx, (2, 4, 16, 16), dtype=jnp.float32)
    target = jax.random.normal(kt, (2, 4, 32, 32), dtype=jnp.float32)

    # default path: size taken from target, mode='nearest' (width-first order)
    out = jax.block_until_ready(to_onnx_upsample(x, target))
    assert out.shape == (2, 4, 32, 32), out.shape
    np.testing.assert_allclose(np.asarray(out),
                               np.asarray(_reference_nearest(x, 32, 32)),
                               rtol=1e-5, atol=1e-5)

    # asymmetric size -> exercises the height-first pass order
    out_a = jax.block_until_ready(to_onnx_upsample(x, None, size=(24, 48)))
    assert out_a.shape == (2, 4, 24, 48), out_a.shape
    np.testing.assert_allclose(np.asarray(out_a),
                               np.asarray(_reference_nearest(x, 24, 48)),
                               rtol=1e-5, atol=1e-5)

    # scale_factor + bilinear, checked against a plain-JAX separable reference
    out2 = jax.block_until_ready(
        to_onnx_upsample(x, None, scale_factor=2, mode="bilinear",
                         align_corners=False))
    assert out2.shape == (2, 4, 32, 32), out2.shape
    np.testing.assert_allclose(
        np.asarray(out2),
        np.asarray(_reference_separable(x, 32, 32, "bilinear", False)),
        rtol=1e-4, atol=1e-4)

    # bf16 input: nearest selection is exact; exercises the mixed-dtype path
    xb = x.astype(jnp.bfloat16)
    out_b = jax.block_until_ready(to_onnx_upsample(xb, target))
    np.testing.assert_allclose(
        np.asarray(out_b.astype(jnp.float32)),
        np.asarray(_reference_nearest(xb, 32, 32).astype(jnp.float32)),
        rtol=1e-2, atol=1e-2)

    print("KERNEL_OK")
</pallas_src>

<mosaic_0001>
module attributes {stable_mosaic.version = 11 : i64} {
  func.func @_upsample_kernel(%arg0: i32, %arg1: memref<2x32x16xf32, #tpu.memory_space<vmem>>, %arg2: memref<16x32xf32, #tpu.memory_space<vmem>>, %arg3: memref<2x16x16xf32, #tpu.memory_space<vmem>>, %arg4: memref<2x32x32xf32, #tpu.memory_space<vmem>>, %arg5: memref<2x16x32xf32, #tpu.memory_space<vmem>>) attributes {dimension_semantics = [#tpu.dimension_semantics<parallel>], iteration_bounds = array<i64: 4>, scalar_prefetch = 0 : i64, scratch_operands = 1 : i64, tpu.core_type = #tpu.core_type<tc>, window_params = [{pipeline_mode = #tpu.pipeline_mode<synchronous>, transform_indices = @transform_0, window_bounds = array<i64: 2, 32, 16>}, {pipeline_mode = #tpu.pipeline_mode<synchronous>, transform_indices = @transform_1, window_bounds = array<i64: 16, 32>}, {transform_indices = @transform_2, window_bounds = array<i64: 2, 16, 16>}, {transform_indices = @transform_3, window_bounds = array<i64: 2, 32, 32>}]} {
    %c0 = arith.constant 0 : index
    %c0_0 = arith.constant 0 : index
    %c0_1 = arith.constant 0 : index
    %0 = vector.load %arg3[%c0, %c0_0, %c0_1] : memref<2x16x16xf32, #tpu.memory_space<vmem>>, vector<2x16x16xf32>
    %1 = vector.shape_cast %0 : vector<2x16x16xf32> to vector<32x16xf32>
    %c0_2 = arith.constant 0 : index
    %c0_3 = arith.constant 0 : index
    %2 = vector.load %arg2[%c0_2, %c0_3] : memref<16x32xf32, #tpu.memory_space<vmem>>, vector<16x32xf32>
    %cst = arith.constant dense<0.000000e+00> : vector<32x32xf32>
    %3 = tpu.matmul %1, %2, %cst {dimension_numbers = #tpu.dot_dimension_numbers<[1], [0], [0], [1], [0, 0, 1, 1], [], []>} : vector<32x16xf32>, vector<16x32xf32>, vector<32x32xf32> -> vector<32x32xf32>
    %4 = vector.shape_cast %3 : vector<32x32xf32> to vector<2x16x32xf32>
    %c0_4 = arith.constant 0 : index
    %c0_5 = arith.constant 0 : index
    %c0_6 = arith.constant 0 : index
    %5 = vector.load %arg5[%c0_4, %c0_5, %c0_6] : memref<2x16x32xf32, #tpu.memory_space<vmem>>, vector<2x16x32xf32>
    tpu.vector_store %arg5[%c0_4, %c0_5, %c0_6], %4 {strides = array<i32>} : memref<2x16x32xf32, #tpu.memory_space<vmem>>, vector<2x16x32xf32>,
    %c0_7 = arith.constant 0 : index
    %c0_8 = arith.constant 0 : index
    %c0_9 = arith.constant 0 : index
    %6 = vector.load %arg1[%c0_7, %c0_8, %c0_9] : memref<2x32x16xf32, #tpu.memory_space<vmem>>, vector<2x32x16xf32>
    %c0_10 = arith.constant 0 : index
    %c0_11 = arith.constant 0 : index
    %c0_12 = arith.constant 0 : index
    %7 = vector.load %arg5[%c0_10, %c0_11, %c0_12] : memref<2x16x32xf32, #tpu.memory_space<vmem>>, vector<2x16x32xf32>
    "tpu.trace_start"() <{level = 10 : i32, message = "toh,thw->tow"}> : () -> ()
    %cst_13 = arith.constant dense<0.000000e+00> : vector<2x32x32xf32>
    %8 = tpu.matmul %6, %7, %cst_13 {dimension_numbers = #tpu.dot_dimension_numbers<[2], [1], [1], [2], [0, 0, 0, 1, 1, 2], [0], [0]>} : vector<2x32x16xf32>, vector<2x16x32xf32>, vector<2x32x32xf32> -> vector<2x32x32xf32>
    "tpu.trace_stop"() : () -> ()
    %c0_14 = arith.constant 0 : index
    %c0_15 = arith.constant 0 : index
    %c0_16 = arith.constant 0 : index
    %9 = vector.load %arg4[%c0_14, %c0_15, %c0_16] : memref<2x32x32xf32, #tpu.memory_space<vmem>>, vector<2x32x32xf32>
    tpu.vector_store %arg4[%c0_14, %c0_15, %c0_16], %8 {strides = array<i32>} : memref<2x32x32xf32, #tpu.memory_space<vmem>>, vector<2x32x32xf32>,
    return
  }
  func.func @transform_0(%arg0: i32) -> (i32, i32, i32) {
    %c0_i32 = arith.constant 0 : i32
    %c0_i32_0 = arith.constant 0 : i32
    %c0_i32_1 = arith.constant 0 : i32
    %c0_i32_2 = arith.constant 0 : i32
    return %c0_i32, %c0_i32_0, %c0_i32_1 : i32, i32, i32
  }
  func.func @transform_1(%arg0: i32) -> (i32, i32) {
    %c0_i32 = arith.constant 0 : i32
    %c0_i32_0 = arith.constant 0 : i32
    %c0_i32_1 = arith.constant 0 : i32
    return %c0_i32, %c0_i32_0 : i32, i32
  }
  func.func @transform_2(%arg0: i32) -> (i32, i32, i32) {
    %c0_i32 = arith.constant 0 : i32
    %c0_i32_0 = arith.constant 0 : i32
    %c0_i32_1 = arith.constant 0 : i32
    return %arg0, %c0_i32, %c0_i32_0 : i32, i32, i32
  }
  func.func @transform_3(%arg0: i32) -> (i32, i32, i32) {
    %c0_i32 = arith.constant 0 : i32
    %c0_i32_0 = arith.constant 0 : i32
    %c0_i32_1 = arith.constant 0 : i32
    return %arg0, %c0_i32, %c0_i32_0 : i32, i32, i32
  }
}

</mosaic_0001>

<llo_original>
// kernel: tpu_custom_call.1
$region0: #{tpu_custom_call.1}
  #allocation0 [shape = 'u32[]', space=smem, size = 0x4, offset = 0x4, fixed_abs, tag = 'smem constant byte address 0x4 - core index']
  #allocation1 [shape = 'u32[144,128]{1,0:T(1,128)}', space=vmem, size = 0x12000, scoped, tag = 'internal scratch']
  #allocation2 [shape = 'f32[2,16,32]{2,1,0:T(8,128)}', space=vmem, size = 0x4000, scoped, tag = 'scratch operand']
  %s0 = inlined_call_operand.vmem [shape: f32[2,32,16], index: 0, kind: input, shape index: {}]
  %s1 = inlined_call_operand.vmem [shape: f32[16,32], index: 1, kind: input, shape index: {}]
  %s2 = inlined_call_operand.hbm [shape: f32[8,16,16], index: 2, kind: input, shape index: {}]
  %s3 = inlined_call_operand.hbm [shape: f32[8,32,32], index: 3, kind: output, shape index: {}]
  %s4 = sld [smem:[#allocation0]]
  $region49: #{tpu_custom_call.1} parent=0
    _
  %s6 = ssub.s32 1, %s4
  %s7 = scalar_select 0, %s6, %s4
  $region1: #{tpu_custom_call.1} parent=0
    #allocation3 [shape = 'u8[32768]{0}', space=vmem, size = 0x8000, scoped, tag = 'input window, operand 2']
    #allocation4 [shape = 's32[2]{0}', space=sflag, size = 0x8, scoped, tag = 'scoped memory for tpu_custom_call.1']
    #allocation5 [shape = 's32[2]{0}', space=sflag, size = 0x8, scoped, tag = 'scoped memory for tpu_custom_call.1']
    #allocation6 [shape = 'u8[65536]{0}', space=vmem, size = 0x10000, scoped, tag = 'output window, operand 0']
    %8 = vsyncpa [#allocation4], 0
    %s9 = scalar_lea.sflag [#allocation4], 1
    %10 = vsyncpa %s9, 0
    %11 = vsyncpa [#allocation5], 0
    %s12 = scalar_lea.sflag [#allocation5], 1
    %13 = vsyncpa %s12, 0
    loop: start=0, step=1, limit=6
    $region2: #{tpu_custom_call.1} parent=1 // loop_pre_header
      _
    $region3: #{tpu_custom_call.1} parent=1 // loop_header
      %s15 = sphi 0, %s19
      %p16 = scmp.ge.s32.totalorder %s15, 6
      %s23 = sphi 0, %s23
      %s25 = sphi 0, %s23
      %s26 = sphi 0, %s25
      %s40 = sphi 0, %s26
      %s44 = sphi 0, %s44
      %s46 = sphi 0, %s44
      %s47 = sphi 0, %s46
      %s61 = sphi 0, %s47
      %s67 = sphi 0, %s69
      %s70 = sphi 0, %s67
      %s71 = sphi 0, %s70
      %s87 = sphi 0, %s71
      %s93 = sphi 0, %s95
      %s96 = sphi 0, %s93
      %s97 = sphi 0, %s96
      %s113 = sphi 0, %s97
    $region4: #{tpu_custom_call.1} parent=1 // loop_header_branch
      %18 = sbr.rel (%p16) target = $region8
    $region5: #{tpu_custom_call.1} parent=1 // loop_body
      %s20 = ssub.s32 %s15, 1
      %s21 = ssub.s32 %s15, 2
      %s22 = sadd.s32 %s15, 1
      %s24 = sadd.s32 %s23, 1
      %p27 = scmp.eq.s32.totalorder %s15, 3
      %p28 = scmp.ne.s32.totalorder %s23, %s25
      %p29 = scmp.eq.s32.totalorder %s15, 0
      %p30 = por %p28, %p29
      %p31 = scmp.ne.s32.totalorder %s23, %s25
      %p32 = scmp.eq.s32.totalorder %s20, 3
      %p33 = por %p31, %p32
      %p34 = scmp.ne.s32.totalorder %s25, %s26
      %p35 = scmp.eq.s32.totalorder %s20, 0
      %p36 = por %p34, %p35
      %p37 = scmp.ne.s32.totalorder %s25, %s26
      %p38 = scmp.eq.s32.totalorder %s21, 3
      %p39 = por %p37, %p38
      %p41 = scmp.ne.s32.totalorder %s26, %s40
      %p42 = scmp.eq.s32.totalorder %s21, 0
      %p43 = por %p41, %p42
      %s45 = sadd.s32 %s44, 1
      %p48 = scmp.eq.s32.totalorder %s15, 3
      %p49 = scmp.ne.s32.totalorder %s44, %s46
      %p50 = scmp.eq.s32.totalorder %s15, 0
      %p51 = por %p49, %p50
      %p52 = scmp.ne.s32.totalorder %s44, %s46
      %p53 = scmp.eq.s32.totalorder %s20, 3
      %p54 = por %p52, %p53
      %p55 = scmp.ne.s32.totalorder %s46, %s47
      %p56 = scmp.eq.s32.totalorder %s20, 0
      %p57 = por %p55, %p56
      %p58 = scmp.ne.s32.totalorder %s46, %s47
      %p59 = scmp.eq.s32.totalorder %s21, 3
      %p60 = por %p58, %p59
      %p62 = scmp.ne.s32.totalorder %s47, %s61
      %p63 = scmp.eq.s32.totalorder %s21, 0
      %p64 = por %p62, %p63
      %s65 = ssub.s32 %s15, %s22
      %p66 = scmp.eq.s32.totalorder %s65, 0
      %s68 = sadd.s32 %s67, 1
      %s69 = scalar_select %p66, %s67, %s68
      %p72 = pneg %p66
      %p73 = scmp.eq.s32.totalorder %s15, 3
      %p74 = por %p72, %p73
      %p75 = scmp.ne.s32.totalorder %s67, %s70
      %p76 = scmp.eq.s32.totalorder %s15, 0
      %p77 = por %p75, %p76
      %p78 = scmp.ne.s32.totalorder %s67, %s70
      %p79 = scmp.eq.s32.totalorder %s20, 3
      %p80 = por %p78, %p79
      %p81 = scmp.ne.s32.totalorder %s70, %s71
      %p82 = scmp.eq.s32.totalorder %s20, 0
      %p83 = por %p81, %p82
      %p84 = scmp.ne.s32.totalorder %s70, %s71
      %p85 = scmp.eq.s32.totalorder %s21, 3
      %p86 = por %p84, %p85
      %p88 = scmp.ne.s32.totalorder %s71, %s87
      %p89 = scmp.eq.s32.totalorder %s21, 0
      %p90 = por %p88, %p89
      %s91 = ssub.s32 %s15, %s22
      %p92 = scmp.eq.s32.totalorder %s91, 0
      %s94 = sadd.s32 %s93, 1
      %s95 = scalar_select %p92, %s93, %s94
      %p98 = pneg %p92
      %p99 = scmp.eq.s32.totalorder %s15, 3
      %p100 = por %p98, %p99
      %p101 = scmp.ne.s32.totalorder %s93, %s96
      %p102 = scmp.eq.s32.totalorder %s15, 0
      %p103 = por %p101, %p102
      %p104 = scmp.ne.s32.totalorder %s93, %s96
      %p105 = scmp.eq.s32.totalorder %s20, 3
      %p106 = por %p104, %p105
      %p107 = scmp.ne.s32.totalorder %s96, %s97
      %p108 = scmp.eq.s32.totalorder %s20, 0
      %p109 = por %p107, %p108
      %p110 = scmp.ne.s32.totalorder %s96, %s97
      %p111 = scmp.eq.s32.totalorder %s21, 3
      %p112 = por %p110, %p111
      %p114 = scmp.ne.s32.totalorder %s97, %s113
      %p115 = scmp.eq.s32.totalorder %s21, 0
      %p116 = por %p114, %p115
      %p117 = scmp.le.s32.totalorder 1, %s15
      %p118 = scmp.lt.s32.totalorder %s15, 5
      %p119 = pnand %p117, %p118
      %p120 = pneg %p119
      // Predicated region
      $region9: #{tpu_custom_call.1} parent=5 // pred_check
        _
      $region10: #{tpu_custom_call.1} parent=5 // pred_check_branch
        %122 = sbr.rel (%p119) target = $region12
      $region11: #{tpu_custom_call.1} parent=5 // pred_region
        %s123 = ssub.s32 %s15, 1
        // Predicated region
        $region13: #{tpu_custom_call.1} parent=11 // pred_check
          %p124 = pneg %p36
        $region14: #{tpu_custom_call.1} parent=11 // pred_check_branch
          %126 = sbr.rel (%p124) target = $region16
        $region15: #{tpu_custom_call.1} parent=11 // pred_region
          _
        $region16: #{tpu_custom_call.1} parent=11 // pred_fallthru
          _
        // Predicated region
        $region17: #{tpu_custom_call.1} parent=11 // pred_check
          %p127 = pneg %p57
        $region18: #{tpu_custom_call.1} parent=11 // pred_check_branch
          %129 = sbr.rel (%p127) target = $region20
        $region19: #{tpu_custom_call.1} parent=11 // pred_region
          _
        $region20: #{tpu_custom_call.1} parent=11 // pred_fallthru
          _
      $region12: #{tpu_custom_call.1} parent=5 // pred_fallthru
        _
      %p130 = scmp.lt.s32.totalorder %s15, 4
      // Predicated region
      $region21: #{tpu_custom_call.1} parent=5 // pred_check
        %p131 = pneg %p130
      $region22: #{tpu_custom_call.1} parent=5 // pred_check_branch
        %133 = sbr.rel (%p131) target = $region24
      $region23: #{tpu_custom_call.1} parent=5 // pred_region
        // Predicated region
        $region25: #{tpu_custom_call.1} parent=23 // pred_check
          %p134 = pneg %p77
        $region26: #{tpu_custom_call.1} parent=23 // pred_check_branch
          %136 = sbr.rel (%p134) target = $region28
        $region27: #{tpu_custom_call.1} parent=23 // pred_region
          %s137 = sand.u32 %s67, 1
          %s138 = scalar_lea.sflag [#allocation4], %s137
          %s139 = sand.u32 %s67, 1
          %s140 = smul.addr %s139, 32
          %s141 = scalar_lea.vmem [#allocation3], %s140
          %s142 = smul.u32 2, %s15
          %s144 = ssub.s32 512, 512
          %145 = vsyncadd %s138, %s144
          %s146 = smul.addr %s142, 2
          %s147 = smul.addr %s146, 128
          %s148 = scalar_lea.hbm %s2, %s147
          %s149 = sshll.u32 %s141, 4
          %s150 = int_to_ptr.vmem [resolvable:$true] %s149
          %155 = dma.hbm_to_vmem [thread:$0]  %s148, 512, %s150, %s138, 128, 128, 8
        $region28: #{tpu_custom_call.1} parent=23 // pred_fallthru
          _
      $region24: #{tpu_custom_call.1} parent=5 // pred_fallthru
        _
      %p156 = scmp.le.s32.totalorder 1, %s15
      %p157 = scmp.lt.s32.totalorder %s15, 5
      %p158 = pnand %p156, %p157
      %p159 = pneg %p158
      // Predicated region
      $region29: #{tpu_custom_call.1} parent=5 // pred_check
        _
      $region30: #{tpu_custom_call.1} parent=5 // pred_check_branch
        %161 = sbr.rel (%p158) target = $region32
      $region31: #{tpu_custom_call.1} parent=5 // pred_region
        %s162 = ssub.s32 %s15, 1
        %s163 = sand.u32 %s70, 1
        %s164 = scalar_lea.sflag [#allocation4], %s163
        %s165 = sand.u32 %s70, 1
        %s166 = smul.addr %s165, 32
        %s167 = scalar_lea.vmem [#allocation3], %s166
        // Predicated region
        $region33: #{tpu_custom_call.1} parent=31 // pred_check
          %p168 = pneg %p83
        $region34: #{tpu_custom_call.1} parent=31 // pred_check_branch
          %170 = sbr.rel (%p168) target = $region36
        $region35: #{tpu_custom_call.1} parent=31 // pred_region
          %171 = dma.done %s164, 512
        $region36: #{tpu_custom_call.1} parent=31 // pred_fallthru
          _
        %p172 = pneg %p36
        %p173 = pneg %p33
        %p174 = pneg %p57
        %p175 = pneg %p54
        %s176 = sand.u32 %s70, 1
        %s177 = scalar_lea.sflag [#allocation4], %s176
        %s178 = sand.u32 %s70, 1
        %s179 = smul.addr %s178, 32
        %s180 = scalar_lea.vmem [#allocation3], %s179
        %p181 = pneg %p83
        %p182 = pneg %p80
        %p183 = pneg %p109
        %p184 = pneg %p106
        %s185 = sand.u32 %s96, 1
        %s186 = scalar_lea.sflag [#allocation5], %s185
        %s187 = sand.u32 %s96, 1
        %s188 = smul.addr %s187, 64
        %s189 = scalar_lea.vmem [#allocation6], %s188
        %s190 = smul.u32 2, %s20
        %s191 = smul.u32 2, %s20
        %v192 = vld [vmem:[%s167] sm:$0xff]
        %v193 = vld [vmem:[%s167 + $0x8] sm:$0xff]
        %v194 = vld [vmem:[%s167 + $0x10] sm:$0xff]
        %v195 = vld [vmem:[%s167 + $0x18] sm:$0xff]
        %v196 = vld [vmem:[%s1] sm:$0xff]
        %v197 = vld [vmem:[%s1 + $0x8] sm:$0xff]
        %vm198 = vcmask 130048
        %v200 = vsel %vm198, %v192, 0
        %v203 = vsel %vm198, %v193, 0
        %v206 = vsel %vm198, %v194, 0
        %v209 = vsel %vm198, %v195, 0
        %211 = vmatprep.subr.mxu0 0.0
        %212 = vmatpush1.msra.mxu0 %v196
        %213 = vmatprep.subr.mxu0 0.0
        %214 = vmatpush1.msra.mxu0 %v197
        %215 = vmatprep.subr.mxu0 0.0
        %216 = vmatpush1.msra.mxu0 0.0
        %217 = vmatprep.subr.mxu0 0.0
        %218 = vmatpush1.msra.mxu0 0.0
        %219 = vmatprep.subr.mxu0 0.0
        %220 = vmatpush1.msra.mxu0 0.0
        %221 = vmatprep.subr.mxu0 0.0
        %222 = vmatpush1.msra.mxu0 0.0
        %223 = vmatprep.subr.mxu0 0.0
        %224 = vmatpush1.msra.mxu0 0.0
        %225 = vmatprep.subr.mxu0 0.0
        %226 = vmatpush1.msra.mxu0 0.0
        %227 = vmatprep.subr.mxu0 0.0
        %228 = vmatpush1.msra.mxu0 0.0
        %229 = vmatprep.subr.mxu0 0.0
        %230 = vmatpush1.msra.mxu0 0.0
        %231 = vmatprep.subr.mxu0 0.0
        %232 = vmatpush1.msra.mxu0 0.0
        %233 = vmatprep.subr.mxu0 0.0
        %234 = vmatpush1.msra.mxu0 0.0
        %235 = vmatprep.subr.mxu0 0.0
        %236 = vmatpush1.msra.mxu0 0.0
        %237 = vmatprep.subr.mxu0 0.0
        %238 = vmatpush1.msra.mxu0 0.0
        %239 = vmatprep.subr.mxu0 0.0
        %240 = vmatpush1.msra.mxu0 0.0
        %241 = vmatprep.subr.mxu0 0.0
        %242 = vmatpush1.msra.mxu0 0.0
        %243 = vmatprep.subr.mxu0 0.0
        %244 = vmatpush1.msra.mxu0 0.0
        %245 = vmatprep.subr.mxu0 0.0
        %246 = vmatpush1.msra.mxu0 0.0
        %247 = vmatprep.subr.mxu0 0.0
        %248 = vmatpush1.msra.mxu0 0.0
        %249 = vmatprep.subr.mxu0 0.0
        %250 = vmatpush1.msra.mxu0 0.0
        %251 = vmatprep.subr.mxu0 0.0
        %252 = vmatpush1.msra.mxu0 0.0
        %253 = vmatprep.subr.mxu0 0.0
        %254 = vmatpush1.msra.mxu0 0.0
        %255 = vmatprep.subr.mxu0 0.0
        %256 = vmatpush1.msra.mxu0 0.0
        %257 = vmatprep.subr.mxu0 0.0
        %258 = vmatpush1.msra.mxu0 0.0
        %259 = vmatprep.subr.mxu0 0.0
        %260 = vmatpush1.msra.mxu0 0.0
        %261 = vmatprep.subr.mxu0 0.0
        %262 = vmatpush1.msra.mxu0 0.0
        %263 = vmatprep.subr.mxu0 0.0
        %264 = vmatpush1.msra.mxu0 0.0
        %265 = vmatprep.subr.mxu0 0.0
        %266 = vmatpush1.msra.mxu0 0.0
        %267 = vmatprep.subr.mxu0 0.0
        %268 = vmatpush1.msra.mxu0 0.0
        %269 = vmatprep.subr.mxu0 0.0
        %270 = vmatpush1.msra.mxu0 0.0
        %271 = vmatprep.subr.mxu0 0.0
        %272 = vmatpush1.msra.mxu0 0.0
        %273 = vmatprep.subr.mxu0 0.0
        %274 = vmatpush1.msra.mxu0 0.0
        %275 = vmatprep.mubr.f32.mxu0 0.0
        %276 = vmatmul.mubr.f32.gmra.mrb[0].mxu0 %v200
        %v277 = vpop.f32.mrb[0].mxu0
        %v278 = vadd.f32 0.0, %v277
        %v279 = vpop.f32.mrb[0].mxu0
        %280 = vmatprep.mubr.f32.mxu0 0.0
        %281 = vmatmul.mubr.f32.gmra.mrb[0].mxu0 %v203
        %v282 = vpop.f32.mrb[0].mxu0
        %v283 = vadd.f32 0.0, %v282
        %v284 = vpop.f32.mrb[0].mxu0
        %285 = vmatprep.mubr.f32.mxu0 0.0
        %286 = vmatmul.mubr.f32.gmra.mrb[0].mxu0 %v206
        %v287 = vpop.f32.mrb[0].mxu0
        %v288 = vadd.f32 0.0, %v287
        %v289 = vpop.f32.mrb[0].mxu0
        %290 = vmatprep.mubr.f32.mxu0 0.0
        %291 = vmatmul.mubr.f32.gmra.mrb[0].mxu0 %v209
        %v292 = vpop.f32.mrb[0].mxu0
        %v293 = vadd.f32 0.0, %v292
        %v294 = vpop.f32.mrb[0].mxu0
        %295 = vdwg.mxu0
        %vm296 = vcmask 261120
        %297 = vst.msk [vmem:[#allocation2] sm:$0xff] %vm296, %v278
        %298 = vst.msk [vmem:[#allocation2 + $0x8] sm:$0xff] %vm296, %v283
        %299 = vst.msk [vmem:[#allocation2 + $0x10] sm:$0xff] %vm296, %v288
        %300 = vst.msk [vmem:[#allocation2 + $0x18] sm:$0xff] %vm296, %v293
        %v301 = vld [vmem:[%s0] sm:$0xff]
        %v302 = vld [vmem:[%s0 + $0x8] sm:$0xff]
        %v303 = vld [vmem:[%s0 + $0x10] sm:$0xff]
        %v304 = vld [vmem:[%s0 + $0x18] sm:$0xff]
        %v305 = vld [vmem:[%s0 + $0x20] sm:$0xff]
        %v306 = vld [vmem:[%s0 + $0x28] sm:$0xff]
        %v307 = vld [vmem:[%s0 + $0x30] sm:$0xff]
        %v308 = vld [vmem:[%s0 + $0x38] sm:$0xff]
        %v309 = vld [vmem:[#allocation2] sm:$0xff]
        %v310 = vld [vmem:[#allocation2 + $0x8] sm:$0xff]
        %v311 = vld [vmem:[#allocation2 + $0x10] sm:$0xff]
        %v312 = vld [vmem:[#allocation2 + $0x18] sm:$0xff]
        %v314 = vsel %vm198, %v301, 0
        %v317 = vsel %vm198, %v302, 0
        %v320 = vsel %vm198, %v303, 0
        %v323 = vsel %vm198, %v304, 0
        %325 = vmatprep.subr.mxu0 0.0
        %326 = vmatpush1.msra.mxu0 %v309
        %327 = vmatprep.subr.mxu0 0.0
        %328 = vmatpush1.msra.mxu0 %v310
        %329 = vmatprep.subr.mxu0 0.0
        %330 = vmatpush1.msra.mxu0 0.0
        %331 = vmatprep.subr.mxu0 0.0
        %332 = vmatpush1.msra.mxu0 0.0
        %333 = vmatprep.subr.mxu0 0.0
        %334 = vmatpush1.msra.mxu0 0.0
        %335 = vmatprep.subr.mxu0 0.0
        %336 = vmatpush1.msra.mxu0 0.0
        %337 = vmatprep.subr.mxu0 0.0
        %338 = vmatpush1.msra.mxu0 0.0
        %339 = vmatprep.subr.mxu0 0.0
        %340 = vmatpush1.msra.mxu0 0.0
        %341 = vmatprep.subr.mxu0 0.0
        %342 = vmatpush1.msra.mxu0 0.0
        %343 = vmatprep.subr.mxu0 0.0
        %344 = vmatpush1.msra.mxu0 0.0
        %345 = vmatprep.subr.mxu0 0.0
        %346 = vmatpush1.msra.mxu0 0.0
        %347 = vmatprep.subr.mxu0 0.0
        %348 = vmatpush1.msra.mxu0 0.0
        %349 = vmatprep.subr.mxu0 0.0
        %350 = vmatpush1.msra.mxu0 0.0
        %351 = vmatprep.subr.mxu0 0.0
        %352 = vmatpush1.msra.mxu0 0.0
        %353 = vmatprep.subr.mxu0 0.0
        %354 = vmatpush1.msra.mxu0 0.0
        %355 = vmatprep.subr.mxu0 0.0
        %356 = vmatpush1.msra.mxu0 0.0
        %357 = vmatprep.subr.mxu0 0.0
        %358 = vmatpush1.msra.mxu0 0.0
        %359 = vmatprep.subr.mxu0 0.0
        %360 = vmatpush1.msra.mxu0 0.0
        %361 = vmatprep.subr.mxu0 0.0
        %362 = vmatpush1.msra.mxu0 0.0
        %363 = vmatprep.subr.mxu0 0.0
        %364 = vmatpush1.msra.mxu0 0.0
        %365 = vmatprep.subr.mxu0 0.0
        %366 = vmatpush1.msra.mxu0 0.0
        %367 = vmatprep.subr.mxu0 0.0
        %368 = vmatpush1.msra.mxu0 0.0
        %369 = vmatprep.subr.mxu0 0.0
        %370 = vmatpush1.msra.mxu0 0.0
        %371 = vmatprep.subr.mxu0 0.0
        %372 = vmatpush1.msra.mxu0 0.0
        %373 = vmatprep.subr.mxu0 0.0
        %374 = vmatpush1.msra.mxu0 0.0
        %375 = vmatprep.subr.mxu0 0.0
        %376 = vmatpush1.msra.mxu0 0.0
        %377 = vmatprep.subr.mxu0 0.0
        %378 = vmatpush1.msra.mxu0 0.0
        %379 = vmatprep.subr.mxu0 0.0
        %380 = vmatpush1.msra.mxu0 0.0
        %381 = vmatprep.subr.mxu0 0.0
        %382 = vmatpush1.msra.mxu0 0.0
        %383 = vmatprep.subr.mxu0 0.0
        %384 = vmatpush1.msra.mxu0 0.0
        %385 = vmatprep.subr.mxu0 0.0
        %386 = vmatpush1.msra.mxu0 0.0
        %387 = vmatprep.subr.mxu0 0.0
        %388 = vmatpush1.msra.mxu0 0.0
        %389 = vmatprep.mubr.f32.mxu0 0.0
        %390 = vmatmul.mubr.f32.gmra.mrb[0].mxu0 %v314
        %v391 = vpop.f32.mrb[0].mxu0
        %v392 = vadd.f32 0.0, %v391
        %v393 = vpop.f32.mrb[0].mxu0
        %394 = vmatprep.mubr.f32.mxu0 0.0
        %395 = vmatmul.mubr.f32.gmra.mrb[0].mxu0 %v317
        %v396 = vpop.f32.mrb[0].mxu0
        %v397 = vadd.f32 0.0, %v396
        %v398 = vpop.f32.mrb[0].mxu0
        %399 = vmatprep.mubr.f32.mxu0 0.0
        %400 = vmatmul.mubr.f32.gmra.mrb[0].mxu0 %v320
        %v401 = vpop.f32.mrb[0].mxu0
        %v402 = vadd.f32 0.0, %v401
        %v403 = vpop.f32.mrb[0].mxu0
        %404 = vmatprep.mubr.f32.mxu0 0.0
        %405 = vmatmul.mubr.f32.gmra.mrb[0].mxu0 %v323
        %v406 = vpop.f32.mrb[0].mxu0
        %v407 = vadd.f32 0.0, %v406
        %v408 = vpop.f32.mrb[0].mxu0
        %409 = vdwg.mxu0
        %v411 = vsel %vm198, %v305, 0
        %v414 = vsel %vm198, %v306, 0
        %v417 = vsel %vm198, %v307, 0
        %v420 = vsel %vm198, %v308, 0
        %422 = vmatprep.subr.mxu0 0.0
        %423 = vmatpush1.msra.mxu0 %v311
        %424 = vmatprep.subr.mxu0 0.0
        %425 = vmatpush1.msra.mxu0 %v312
        %426 = vmatprep.subr.mxu0 0.0
        %427 = vmatpush1.msra.mxu0 0.0
        %428 = vmatprep.subr.mxu0 0.0
        %429 = vmatpush1.msra.mxu0 0.0
        %430 = vmatprep.subr.mxu0 0.0
        %431 = vmatpush1.msra.mxu0 0.0
        %432 = vmatprep.subr.mxu0 0.0
        %433 = vmatpush1.msra.mxu0 0.0
        %434 = vmatprep.subr.mxu0 0.0
        %435 = vmatpush1.msra.mxu0 0.0
        %436 = vmatprep.subr.mxu0 0.0
        %437 = vmatpush1.msra.mxu0 0.0
        %438 = vmatprep.subr.mxu0 0.0
        %439 = vmatpush1.msra.mxu0 0.0
        %440 = vmatprep.subr.mxu0 0.0
        %441 = vmatpush1.msra.mxu0 0.0
        %442 = vmatprep.subr.mxu0 0.0
        %443 = vmatpush1.msra.mxu0 0.0
        %444 = vmatprep.subr.mxu0 0.0
        %445 = vmatpush1.msra.mxu0 0.0
        %446 = vmatprep.subr.mxu0 0.0
        %447 = vmatpush1.msra.mxu0 0.0
        %448 = vmatprep.subr.mxu0 0.0
        %449 = vmatpush1.msra.mxu0 0.0
        %450 = vmatprep.subr.mxu0 0.0
        %451 = vmatpush1.msra.mxu0 0.0
        %452 = vmatprep.subr.mxu0 0.0
        %453 = vmatpush1.msra.mxu0 0.0
        %454 = vmatprep.subr.mxu0 0.0
        %455 = vmatpush1.msra.mxu0 0.0
        %456 = vmatprep.subr.mxu0 0.0
        %457 = vmatpush1.msra.mxu0 0.0
        %458 = vmatprep.subr.mxu0 0.0
        %459 = vmatpush1.msra.mxu0 0.0
        %460 = vmatprep.subr.mxu0 0.0
        %461 = vmatpush1.msra.mxu0 0.0
        %462 = vmatprep.subr.mxu0 0.0
        %463 = vmatpush1.msra.mxu0 0.0
        %464 = vmatprep.subr.mxu0 0.0
        %465 = vmatpush1.msra.mxu0 0.0
        %466 = vmatprep.subr.mxu0 0.0
        %467 = vmatpush1.msra.mxu0 0.0
        %468 = vmatprep.subr.mxu0 0.0
        %469 = vmatpush1.msra.mxu0 0.0
        %470 = vmatprep.subr.mxu0 0.0
        %471 = vmatpush1.msra.mxu0 0.0
        %472 = vmatprep.subr.mxu0 0.0
        %473 = vmatpush1.msra.mxu0 0.0
        %474 = vmatprep.subr.mxu0 0.0
        %475 = vmatpush1.msra.mxu0 0.0
        %476 = vmatprep.subr.mxu0 0.0
        %477 = vmatpush1.msra.mxu0 0.0
        %478 = vmatprep.subr.mxu0 0.0
        %479 = vmatpush1.msra.mxu0 0.0
        %480 = vmatprep.subr.mxu0 0.0
        %481 = vmatpush1.msra.mxu0 0.0
        %482 = vmatprep.subr.mxu0 0.0
        %483 = vmatpush1.msra.mxu0 0.0
        %484 = vmatprep.subr.mxu0 0.0
        %485 = vmatpush1.msra.mxu0 0.0
        %486 = vmatprep.mubr.f32.mxu0 0.0
        %487 = vmatmul.mubr.f32.gmra.mrb[0].mxu0 %v411
        %v488 = vpop.f32.mrb[0].mxu0
        %v489 = vadd.f32 0.0, %v488
        %v490 = vpop.f32.mrb[0].mxu0
        %491 = vmatprep.mubr.f32.mxu0 0.0
        %492 = vmatmul.mubr.f32.gmra.mrb[0].mxu0 %v414
        %v493 = vpop.f32.mrb[0].mxu0
        %v494 = vadd.f32 0.0, %v493
        %v495 = vpop.f32.mrb[0].mxu0
        %496 = vmatprep.mubr.f32.mxu0 0.0
        %497 = vmatmul.mubr.f32.gmra.mrb[0].mxu0 %v417
        %v498 = vpop.f32.mrb[0].mxu0
        %v499 = vadd.f32 0.0, %v498
        %v500 = vpop.f32.mrb[0].mxu0
        %501 = vmatprep.mubr.f32.mxu0 0.0
        %502 = vmatmul.mubr.f32.gmra.mrb[0].mxu0 %v420
        %v503 = vpop.f32.mrb[0].mxu0
        %v504 = vadd.f32 0.0, %v503
        %v505 = vpop.f32.mrb[0].mxu0
        %506 = vdwg.mxu0
        %507 = vst.msk [vmem:[%s189] sm:$0xff] %vm296, %v392
        %508 = vst.msk [vmem:[%s189 + $0x8] sm:$0xff] %vm296, %v397
        %509 = vst.msk [vmem:[%s189 + $0x10] sm:$0xff] %vm296, %v402
        %510 = vst.msk [vmem:[%s189 + $0x18] sm:$0xff] %vm296, %v407
        %511 = vst.msk [vmem:[%s189 + $0x20] sm:$0xff] %vm296, %v489
        %512 = vst.msk [vmem:[%s189 + $0x28] sm:$0xff] %vm296, %v494
        %513 = vst.msk [vmem:[%s189 + $0x30] sm:$0xff] %vm296, %v499
        %514 = vst.msk [vmem:[%s189 + $0x38] sm:$0xff] %vm296, %v504
        %s515 = sand.u32 %s96, 1
        %s516 = scalar_lea.sflag [#allocation5], %s515
        %s517 = sand.u32 %s96, 1
        %s518 = smul.addr %s517, 64
        %s519 = scalar_lea.vmem [#allocation6], %s518
        // Predicated region
        $region37: #{tpu_custom_call.1} parent=31 // pred_check
          %p520 = pneg %p106
        $region38: #{tpu_custom_call.1} parent=31 // pred_check_branch
          %522 = sbr.rel (%p520) target = $region40
        $region39: #{tpu_custom_call.1} parent=31 // pred_region
          %s523 = smul.u32 2, %s20
          %s525 = ssub.s32 1024, 1024
          %526 = vsyncadd %s516, %s525
          %s527 = smul.addr %s523, 4
          %s528 = smul.addr %s527, 128
          %s529 = scalar_lea.hbm %s3, %s528
          %s530 = sshll.u32 %s519, 4
          %s531 = int_to_ptr.vmem [resolvable:$true] %s530
          %536 = dma.vmem_to_hbm [thread:$0]  %s531, 1024, %s529, %s516, 128, 128, 8
        $region40: #{tpu_custom_call.1} parent=31 // pred_fallthru
          _
      $region32: #{tpu_custom_call.1} parent=5 // pred_fallthru
        _
      %p537 = scmp.le.s32.totalorder 2, %s15
      // Predicated region
      $region41: #{tpu_custom_call.1} parent=5 // pred_check
        %p538 = pneg %p537
      $region42: #{tpu_custom_call.1} parent=5 // pred_check_branch
        %540 = sbr.rel (%p538) target = $region44
      $region43: #{tpu_custom_call.1} parent=5 // pred_region
        %s541 = ssub.s32 %s15, 2
        // Predicated region
        $region45: #{tpu_custom_call.1} parent=43 // pred_check
          %p542 = pneg %p112
        $region46: #{tpu_custom_call.1} parent=43 // pred_check_branch
          %544 = sbr.rel (%p542) target = $region48
        $region47: #{tpu_custom_call.1} parent=43 // pred_region
          %s545 = sand.u32 %s97, 1
          %s546 = scalar_lea.sflag [#allocation5], %s545
          %s547 = sand.u32 %s97, 1
          %s548 = smul.addr %s547, 64
          %s549 = scalar_lea.vmem [#allocation6], %s548
          %550 = dma.done %s546, 1024
        $region48: #{tpu_custom_call.1} parent=43 // pred_fallthru
          _
      $region44: #{tpu_custom_call.1} parent=5 // pred_fallthru
        _
    $region6: #{tpu_custom_call.1} parent=1 // loop_footer
      %s19 = sadd.s32 1, %s15
    $region7: #{tpu_custom_call.1} parent=1 // loop_footer_branch
      %14 = sbr.rel target = $region3
    $region8: #{tpu_custom_call.1} parent=1 // loop_exit
      _
    %551 = vsyncpa [#allocation4], 1
    %s552 = scalar_lea.sflag [#allocation4], 1
    %553 = vsyncpa %s552, 1
    %554 = vsyncpa [#allocation5], 1
    %s555 = scalar_lea.sflag [#allocation5], 1
    %556 = vsyncpa %s555, 1

</llo_original>
